<compile_context>
chip_gen: v7x
topology: tpu7x:2x2x1
jax: 0.10.0
libtpu: 0.0.40
codegen_flags: <defaults>
</compile_context>

<pallas_src>
import jax
import jax.numpy as jnp
from jax import lax
from jax.experimental import pallas as pl
from jax.experimental.pallas import tpu as pltpu

_HUGE = jnp.float32(1e30)  # distance sentinel for padded codebook rows


def _fused_rvq_kernel(x_ref, cb_ref, cbsq_ref,
                      xd_ref, idx_ref, cnt_ref, sq_ref):
    """One token tile through all Q quantizer layers (residual VQ, eval).

    x_ref    : (TILE, C)      input tokens (the layer-0 residual)
    cb_ref   : (Q, K_pad, C)  codebooks, zero-padded to K_pad lanes (VMEM-res.)
    cbsq_ref : (Q, K_pad)     |codebook|^2 (hoisted); padded rows = +HUGE
    xd_ref   : (TILE, C)      sum of dequantized codes over the Q layers
    idx_ref  : (TILE, Q)      code index per token per quantizer
    cnt_ref  : (1, Q, K_pad)  per-tile code-usage counts (partial, lane-dense)
    sq_ref   : (1, Q, 128)    per-tile sum of squared commit error (partial,
                              broadcast over 128 lanes -> unmasked store)
    """
    x = x_ref[...].astype(jnp.float32)
    tile = x.shape[0]
    n_q, k_pad, _ = cb_ref.shape

    lane = lax.broadcasted_iota(jnp.int32, (tile, k_pad), 1)
    q_col = lax.broadcasted_iota(jnp.int32, (tile, n_q), 1)
    q_row_k = lax.broadcasted_iota(jnp.int32, (n_q, k_pad), 0)
    q_row_s = lax.broadcasted_iota(jnp.int32, (n_q, 128), 0)

    residual = x
    quant = jnp.zeros_like(x)
    idx_all = jnp.zeros((tile, n_q), jnp.int32)
    cnt_all = jnp.zeros((n_q, k_pad), jnp.float32)
    sq_all = jnp.zeros((n_q, 128), jnp.float32)

    for qi in range(n_q):  # static, fully unrolled (Q is small)
        cb = cb_ref[qi].astype(jnp.float32)            # (K_pad, C)
        cb_sq = cbsq_ref[qi:qi + 1, :]                 # (1, K_pad)  hoisted

        # Squared-distance matrix on the MXU (contract on channel dim).
        x_sq = jnp.sum(residual * residual, axis=-1, keepdims=True)    # (TILE,1)
        xw = lax.dot_general(residual, cb, (((1,), (1,)), ((), ())),
                             preferred_element_type=jnp.float32)       # (TILE,K_pad)
        dist = x_sq - 2.0 * xw + cb_sq

        # argmin over lanes, first occurrence on ties.
        min_d = jnp.min(dist, axis=-1, keepdims=True)
        idx = jnp.min(jnp.where(dist == min_d, lane, k_pad),
                      axis=-1, keepdims=True)          # (TILE, 1) int32

        # Dequantize via one-hot @ codebook (exact for 0/1 weights).
        onehot = (lane == idx).astype(jnp.float32)     # (TILE, K_pad)
        x_d = jnp.dot(onehot, cb, preferred_element_type=jnp.float32)  # (TILE,C)

        diff = residual - x_d
        residual = diff                                # residual -= x_d
        quant = quant + x_d                            # quantized_out += x_d

        # Scatter this layer's results into the per-tile output slabs
        # (select-based assembly -> one wide store per output at the end).
        idx_all = jnp.where(q_col == qi, idx, idx_all)
        cnt_all = jnp.where(q_row_k == qi,
                            jnp.sum(onehot, axis=0, keepdims=True), cnt_all)
        sq_all = jnp.where(q_row_s == qi,
                           jnp.sum(diff * diff, keepdims=True), sq_all)

    xd_ref[...] = quant.astype(xd_ref.dtype)
    idx_ref[...] = idx_all
    cnt_ref[0] = cnt_all
    sq_ref[0] = sq_all


def _choose_token_tile(nt):
    """Largest tile (multiple of 8, <= 1024) that divides NT; else full NT."""
    for t in (1024, 512, 256, 128, 64, 32, 16, 8):
        if nt % t == 0:
            return t
    return nt


def _fused_rvq_call(x_flat, cb_pad, cb_sq):
    nt, c = x_flat.shape
    n_q, k_pad, _ = cb_pad.shape
    tile = _choose_token_tile(nt)
    n_tiles = nt // tile
    return pl.pallas_call(
        _fused_rvq_kernel,
        grid=(n_tiles,),
        out_shape=(
            jax.ShapeDtypeStruct((nt, c), jnp.float32),          # quantized_out
            jax.ShapeDtypeStruct((nt, n_q), jnp.int32),          # code indices
            jax.ShapeDtypeStruct((n_tiles, n_q, k_pad), jnp.float32),  # counts
            jax.ShapeDtypeStruct((n_tiles, n_q, 128), jnp.float32),    # sq err
        ),
        in_specs=[
            pl.BlockSpec((tile, c), lambda i: (i, 0)),
            pl.BlockSpec((n_q, k_pad, c), lambda i: (0, 0, 0)),  # VMEM-resident
            pl.BlockSpec((n_q, k_pad), lambda i: (0, 0)),        # hoisted |cb|^2
        ],
        out_specs=(
            pl.BlockSpec((tile, c), lambda i: (i, 0)),
            pl.BlockSpec((tile, n_q), lambda i: (i, 0)),
            pl.BlockSpec((1, n_q, k_pad), lambda i: (i, 0, 0)),
            pl.BlockSpec((1, n_q, 128), lambda i: (i, 0, 0)),
        ),
        compiler_params=pltpu.CompilerParams(
            dimension_semantics=("parallel",)),
    )(x_flat, cb_pad, cb_sq)


@jax.jit
def residual_vq_forward(x, codebooks):
    """Fused eval forward for a stack of Q RQuantizeEMAReset layers.

    x: (N, C, T) float32, codebooks: (Q, K, C) float32.
    Returns (quantized_out (N, C, T), mean commit loss, mean perplexity,
             all code indices (N, T, Q)).
    """
    n, c, t = x.shape
    n_q, k, _ = codebooks.shape
    k_pad = max(128, -(-k // 128) * 128)  # lane-pad codebook to >= 128

    cb = codebooks.astype(jnp.float32)
    cb_pad = jnp.pad(cb, ((0, 0), (0, k_pad - k), (0, 0)))
    cb_sq = jnp.sum(cb_pad * cb_pad, axis=-1)                          # (Q,K_pad)
    cb_sq = jnp.where(jnp.arange(k_pad)[None, :] >= k, _HUGE, cb_sq)   # mask pad

    # TODO(synk): this (N,C,T)->(NT,C) transpose is a wrapper-side XLA op; for
    # 128-aligned T it could be folded into the kernel tiles to save one HBM
    # round trip.
    x_flat = jnp.transpose(x, (0, 2, 1)).reshape(n * t, c)

    xd_flat, idx_flat, cnt, sq = _fused_rvq_call(x_flat, cb_pad, cb_sq)

    quantized = jnp.transpose(xd_flat.reshape(n, t, c), (0, 2, 1))

    # Global stats from per-tile partials (correct across tiles / cores).
    counts = jnp.sum(cnt, axis=0)[:, :k]                               # (Q, K)
    prob = counts / jnp.sum(counts, axis=-1, keepdims=True)
    perplexity = jnp.exp(-jnp.sum(prob * jnp.log(prob + 1e-7), axis=-1))
    commit = jnp.sum(sq[:, :, 0], axis=0) / jnp.float32(n * t * c)     # (Q,)

    indices = idx_flat.reshape(n, t, n_q)
    return quantized, jnp.mean(commit), jnp.mean(perplexity), indices


def rquantize_ema_reset_forward(x, codebook):
    """RQuantizeEMAReset.forward (eval mode, return_idx=True semantics).

    x: (N, C, T), codebook: (K, C).
    Returns (x_d (N, C, T), code_idx (N, T), commit_loss, perplexity).
    """
    x_d, commit, perp, idx = residual_vq_forward(x, codebook[None, ...])
    return x_d, idx[..., 0], commit, perp


# ----------------------------- references -----------------------------------
def _reference_single(x, codebook):
    n, c, t = x.shape
    xf = jnp.transpose(x, (0, 2, 1)).reshape(n * t, c)
    dist = (jnp.sum(xf ** 2, -1, keepdims=True) - 2.0 * xf @ codebook.T
            + jnp.sum(codebook ** 2, -1)[None, :])
    idx = jnp.argmin(dist, axis=-1)
    x_d = codebook[idx]
    commit = jnp.mean((xf - x_d) ** 2)
    counts = jnp.sum(jax.nn.one_hot(idx, codebook.shape[0]), axis=0)
    prob = counts / jnp.sum(counts)
    perp = jnp.exp(-jnp.sum(prob * jnp.log(prob + 1e-7)))
    x_d_nct = jnp.transpose(x_d.reshape(n, t, c), (0, 2, 1))
    return x_d_nct, idx.reshape(n, t).astype(jnp.int32), commit, perp


def _reference_residual(x, codebooks):
    n, c, t = x.shape
    n_q = codebooks.shape[0]
    residual = jnp.transpose(x, (0, 2, 1)).reshape(n * t, c)
    quantized = jnp.zeros_like(residual)
    losses, perps = [], []
    for qi in range(n_q):
        cb = codebooks[qi]
        dist = (jnp.sum(residual ** 2, -1, keepdims=True)
                - 2.0 * residual @ cb.T + jnp.sum(cb ** 2, -1)[None, :])
        idx = jnp.argmin(dist, axis=-1)
        x_d = cb[idx]
        losses.append(jnp.mean((residual - x_d) ** 2))
        counts = jnp.sum(jax.nn.one_hot(idx, cb.shape[0]), axis=0)
        prob = counts / jnp.sum(counts)
        perps.append(jnp.exp(-jnp.sum(prob * jnp.log(prob + 1e-7))))
        residual = residual - x_d
        quantized = quantized + x_d
    quantized = jnp.transpose(quantized.reshape(n, t, c), (0, 2, 1))
    return quantized, sum(losses) / n_q, sum(perps) / n_q


if __name__ == "__main__":
    # RQuantizeEMAReset(nb_code=64, code_dim=32, mu=0.99); mu is EMA/train-only.
    nb_code, code_dim = 64, 32
    N, T = 2, 16

    key = jax.random.PRNGKey(0)
    kx, kcb = jax.random.split(key)
    x = jax.random.normal(kx, (N, code_dim, T), dtype=jnp.float32)
    # Deterministic synthetic codebook (stand-in for the EMA-learned buffer).
    codebook = 0.1 * jax.random.normal(kcb, (nb_code, code_dim),
                                       dtype=jnp.float32)

    # --- Single RQuantizeEMAReset layer (eval forward, return_idx=True) -----
    x_d, code_idx, commit_loss, perplexity = rquantize_ema_reset_forward(
        x, codebook)
    jax.block_until_ready((x_d, code_idx, commit_loss, perplexity))

    xd_exp, idx_exp, loss_exp, perp_exp = _reference_single(x, codebook)
    assert x_d.shape == (N, code_dim, T)
    assert code_idx.shape == (N, T)
    assert jnp.array_equal(code_idx, idx_exp)
    assert jnp.allclose(x_d, xd_exp, atol=1e-5, rtol=1e-5)
    assert jnp.allclose(commit_loss, loss_exp, atol=1e-5, rtol=1e-5)
    assert jnp.allclose(perplexity, perp_exp, atol=1e-4, rtol=1e-4)

    # --- Fused residual stack of 4 quantizers (exercises the fused-Q path) --
    num_q = 4
    cb_keys = jax.random.split(kcb, num_q)
    codebooks = jnp.stack(
        [0.1 * jax.random.normal(k, (nb_code, code_dim), dtype=jnp.float32)
         for k in cb_keys])
    q_out, loss, perp, all_idx = residual_vq_forward(x, codebooks)
    jax.block_until_ready((q_out, loss, perp, all_idx))

    q_exp, l_exp, p_exp = _reference_residual(x, codebooks)
    assert q_out.shape == (N, code_dim, T)
    assert all_idx.shape == (N, T, num_q)
    assert jnp.allclose(q_out, q_exp, atol=1e-5, rtol=1e-5)
    assert jnp.allclose(loss, l_exp, atol=1e-5, rtol=1e-5)
    assert jnp.allclose(perp, p_exp, atol=1e-4, rtol=1e-4)

    print("KERNEL_OK")
</pallas_src>

<mosaic_0001>
module attributes {stable_mosaic.version = 11 : i64} {
  func.func @_fused_rvq_kernel(%arg0: i32, %arg1: memref<32x32xf32, #tpu.memory_space<vmem>>, %arg2: memref<1x128x32xf32, #tpu.memory_space<vmem>>, %arg3: memref<1x128xf32, #tpu.memory_space<vmem>>, %arg4: memref<32x32xf32, #tpu.memory_space<vmem>>, %arg5: memref<32x1xi32, #tpu.memory_space<vmem>>, %arg6: memref<1x1x128xf32, #tpu.memory_space<vmem>>, %arg7: memref<1x1x128xf32, #tpu.memory_space<vmem>>) attributes {dimension_semantics = [#tpu.dimension_semantics<parallel>], iteration_bounds = array<i64: 1>, scalar_prefetch = 0 : i64, scratch_operands = 0 : i64, tpu.core_type = #tpu.core_type<tc>, window_params = [{transform_indices = @transform_0, window_bounds = array<i64: 32, 32>}, {pipeline_mode = #tpu.pipeline_mode<synchronous>, transform_indices = @transform_1, window_bounds = array<i64: 1, 128, 32>}, {pipeline_mode = #tpu.pipeline_mode<synchronous>, transform_indices = @transform_2, window_bounds = array<i64: 1, 128>}, {transform_indices = @transform_3, window_bounds = array<i64: 32, 32>}, {transform_indices = @transform_4, window_bounds = array<i64: 32, 1>}, {transform_indices = @transform_5, window_bounds = array<i64: 1, 1, 128>}, {transform_indices = @transform_6, window_bounds = array<i64: 1, 1, 128>}]} {
    %c0 = arith.constant 0 : index
    %c0_0 = arith.constant 0 : index
    %0 = vector.load %arg1[%c0, %c0_0] : memref<32x32xf32, #tpu.memory_space<vmem>>, vector<32x32xf32>
    %1 = tpu.iota {dimensions = array<i32: 1>} : vector<32x128xi32>
    %2 = tpu.iota {dimensions = array<i32: 1>} : vector<32x1xi32>
    %3 = tpu.iota {dimensions = array<i32: 0>} : vector<1x128xi32>
    %4 = tpu.iota {dimensions = array<i32: 0>} : vector<1x128xi32>
    %cst = arith.constant 0.000000e+00 : f32
    %5 = vector.broadcast %cst : f32 to vector<32x32xf32>
    %c0_i32 = arith.constant 0 : i32
    %6 = vector.broadcast %c0_i32 : i32 to vector<32x1xi32>
    %cst_1 = arith.constant 0.000000e+00 : f32
    %7 = vector.broadcast %cst_1 : f32 to vector<1x128xf32>
    %cst_2 = arith.constant 0.000000e+00 : f32
    %8 = vector.broadcast %cst_2 : f32 to vector<1x128xf32>
    %c0_3 = arith.constant 0 : index
    %c0_4 = arith.constant 0 : index
    %c0_5 = arith.constant 0 : index
    %9 = vector.load %arg2[%c0_3, %c0_4, %c0_5] : memref<1x128x32xf32, #tpu.memory_space<vmem>>, vector<1x128x32xf32>
    %10 = vector.shape_cast %9 : vector<1x128x32xf32> to vector<128x32xf32>
    %c0_6 = arith.constant 0 : index
    %c0_7 = arith.constant 0 : index
    %11 = vector.load %arg3[%c0_6, %c0_7] : memref<1x128xf32, #tpu.memory_space<vmem>>, vector<1x128xf32>
    %12 = arith.mulf %0, %0 : vector<32x32xf32>
    %cst_8 = arith.constant dense<0.000000e+00> : vector<32xf32>
    %13 = vector.multi_reduction <add>, %12, %cst_8 [1] : vector<32x32xf32> to vector<32xf32>
    %14 = vector.shape_cast %13 : vector<32xf32> to vector<32x1xf32>
    %cst_9 = arith.constant dense<0.000000e+00> : vector<32x128xf32>
    %15 = tpu.matmul %0, %10, %cst_9 {dimension_numbers = #tpu.dot_dimension_numbers<[1], [1], [0], [0], [0, 0, 1, 0], [], []>} : vector<32x32xf32>, vector<128x32xf32>, vector<32x128xf32> -> vector<32x128xf32>
    %cst_10 = arith.constant 2.000000e+00 : f32
    %16 = vector.broadcast %cst_10 : f32 to vector<32x128xf32>
    %17 = arith.mulf %16, %15 : vector<32x128xf32>
    %18 = vector.broadcast %14 : vector<32x1xf32> to vector<32x128xf32>
    %19 = arith.subf %18, %17 : vector<32x128xf32>
    %20 = vector.broadcast %11 : vector<1x128xf32> to vector<32x128xf32>
    %21 = arith.addf %19, %20 : vector<32x128xf32>
    %cst_11 = arith.constant dense<0x7F800000> : vector<32xf32>
    %22 = vector.multi_reduction <minimumf>, %21, %cst_11 [1] : vector<32x128xf32> to vector<32xf32>
    %23 = vector.shape_cast %22 : vector<32xf32> to vector<32x1xf32>
    %24 = vector.broadcast %23 : vector<32x1xf32> to vector<32x128xf32>
    %25 = arith.cmpf oeq, %21, %24 : vector<32x128xf32>
    %c128_i32 = arith.constant 128 : i32
    %26 = vector.broadcast %c128_i32 : i32 to vector<32x128xi32>
    %27 = arith.select %25, %1, %26 : vector<32x128xi1>, vector<32x128xi32>
    %cst_12 = arith.constant dense<2147483647> : vector<32xi32>
    %28 = vector.multi_reduction <minsi>, %27, %cst_12 [1] : vector<32x128xi32> to vector<32xi32>
    %29 = vector.shape_cast %28 : vector<32xi32> to vector<32x1xi32>
    %30 = vector.broadcast %29 : vector<32x1xi32> to vector<32x128xi32>
    %31 = arith.cmpi eq, %1, %30 : vector<32x128xi32>
    %32 = arith.extui %31 : vector<32x128xi1> to vector<32x128xi32>
    %33 = arith.sitofp %32 : vector<32x128xi32> to vector<32x128xf32>
    %cst_13 = arith.constant dense<0.000000e+00> : vector<32x32xf32>
    %34 = tpu.matmul %33, %10, %cst_13 {dimension_numbers = #tpu.dot_dimension_numbers<[1], [0], [0], [1], [0, 0, 1, 1], [], []>} : vector<32x128xf32>, vector<128x32xf32>, vector<32x32xf32> -> vector<32x32xf32>
    %35 = arith.subf %0, %34 : vector<32x32xf32>
    %36 = arith.addf %5, %34 : vector<32x32xf32>
    %c0_i32_14 = arith.constant 0 : i32
    %37 = vector.broadcast %c0_i32_14 : i32 to vector<32x1xi32>
    %38 = arith.cmpi eq, %2, %37 : vector<32x1xi32>
    %39 = arith.select %38, %29, %6 : vector<32x1xi1>, vector<32x1xi32>
    %c0_i32_15 = arith.constant 0 : i32
    %40 = vector.broadcast %c0_i32_15 : i32 to vector<1x128xi32>
    %41 = arith.cmpi eq, %3, %40 : vector<1x128xi32>
    %cst_16 = arith.constant dense<0.000000e+00> : vector<128xf32>
    %42 = vector.multi_reduction <add>, %33, %cst_16 [0] : vector<32x128xf32> to vector<128xf32>
    %43 = vector.shape_cast %42 : vector<128xf32> to vector<1x128xf32>
    %44 = arith.select %41, %43, %7 : vector<1x128xi1>, vector<1x128xf32>
    %c0_i32_17 = arith.constant 0 : i32
    %45 = vector.broadcast %c0_i32_17 : i32 to vector<1x128xi32>
    %46 = arith.cmpi eq, %4, %45 : vector<1x128xi32>
    %47 = arith.mulf %35, %35 : vector<32x32xf32>
    %48 = vector.shape_cast %47 : vector<32x32xf32> to vector<1x32x32xf32>
    %cst_18 = arith.constant dense<0.000000e+00> : vector<1xf32>
    %49 = vector.multi_reduction <add>, %48, %cst_18 [1, 2] : vector<1x32x32xf32> to vector<1xf32>
    %50 = vector.shape_cast %49 : vector<1xf32> to vector<1x1x1xf32>
    %51 = vector.extract %50[0, 0, 0] : f32 from vector<1x1x1xf32>
    %52 = vector.broadcast %51 : f32 to vector<1x1xf32>
    %53 = vector.shape_cast %52 : vector<1x1xf32> to vector<1x1xf32>
    %54 = vector.broadcast %53 : vector<1x1xf32> to vector<1x128xf32>
    %55 = arith.select %46, %54, %8 : vector<1x128xi1>, vector<1x128xf32>
    %c0_19 = arith.constant 0 : index
    %c0_20 = arith.constant 0 : index
    %56 = vector.load %arg4[%c0_19, %c0_20] : memref<32x32xf32, #tpu.memory_space<vmem>>, vector<32x32xf32>
    tpu.vector_store %arg4[%c0_19, %c0_20], %36 {strides = array<i32>} : memref<32x32xf32, #tpu.memory_space<vmem>>, vector<32x32xf32>,
    %c0_21 = arith.constant 0 : index
    %c0_22 = arith.constant 0 : index
    %57 = vector.load %arg5[%c0_21, %c0_22] : memref<32x1xi32, #tpu.memory_space<vmem>>, vector<32x1xi32>
    tpu.vector_store %arg5[%c0_21, %c0_22], %39 {strides = array<i32>} : memref<32x1xi32, #tpu.memory_space<vmem>>, vector<32x1xi32>,
    %c0_23 = arith.constant 0 : index
    %c0_24 = arith.constant 0 : index
    %c0_25 = arith.constant 0 : index
    %58 = vector.load %arg6[%c0_23, %c0_24, %c0_25] : memref<1x1x128xf32, #tpu.memory_space<vmem>>, vector<1x1x128xf32>
    %59 = vector.shape_cast %58 : vector<1x1x128xf32> to vector<1x128xf32>
    %60 = vector.shape_cast %44 : vector<1x128xf32> to vector<1x1x128xf32>
    tpu.vector_store %arg6[%c0_23, %c0_24, %c0_25], %60 {strides = array<i32>} : memref<1x1x128xf32, #tpu.memory_space<vmem>>, vector<1x1x128xf32>,
    %c0_26 = arith.constant 0 : index
    %c0_27 = arith.constant 0 : index
    %c0_28 = arith.constant 0 : index
    %61 = vector.load %arg7[%c0_26, %c0_27, %c0_28] : memref<1x1x128xf32, #tpu.memory_space<vmem>>, vector<1x1x128xf32>
    %62 = vector.shape_cast %61 : vector<1x1x128xf32> to vector<1x128xf32>
    %63 = vector.shape_cast %55 : vector<1x128xf32> to vector<1x1x128xf32>
    tpu.vector_store %arg7[%c0_26, %c0_27, %c0_28], %63 {strides = array<i32>} : memref<1x1x128xf32, #tpu.memory_space<vmem>>, vector<1x1x128xf32>,
    return
  }
  func.func @transform_0(%arg0: i32) -> (i32, i32) {
    %c0_i32 = arith.constant 0 : i32
    %c0_i32_0 = arith.constant 0 : i32
    return %arg0, %c0_i32 : i32, i32
  }
  func.func @transform_1(%arg0: i32) -> (i32, i32, i32) {
    %c0_i32 = arith.constant 0 : i32
    %c0_i32_0 = arith.constant 0 : i32
    %c0_i32_1 = arith.constant 0 : i32
    %c0_i32_2 = arith.constant 0 : i32
    return %c0_i32, %c0_i32_0, %c0_i32_1 : i32, i32, i32
  }
  func.func @transform_2(%arg0: i32) -> (i32, i32) {
    %c0_i32 = arith.constant 0 : i32
    %c0_i32_0 = arith.constant 0 : i32
    %c0_i32_1 = arith.constant 0 : i32
    return %c0_i32, %c0_i32_0 : i32, i32
  }
  func.func @transform_3(%arg0: i32) -> (i32, i32) {
    %c0_i32 = arith.constant 0 : i32
    %c0_i32_0 = arith.constant 0 : i32
    return %arg0, %c0_i32 : i32, i32
  }
  func.func @transform_4(%arg0: i32) -> (i32, i32) {
    %c0_i32 = arith.constant 0 : i32
    %c0_i32_0 = arith.constant 0 : i32
    return %arg0, %c0_i32 : i32, i32
  }
  func.func @transform_5(%arg0: i32) -> (i32, i32, i32) {
    %c0_i32 = arith.constant 0 : i32
    %c0_i32_0 = arith.constant 0 : i32
    %c0_i32_1 = arith.constant 0 : i32
    return %arg0, %c0_i32, %c0_i32_0 : i32, i32, i32
  }
  func.func @transform_6(%arg0: i32) -> (i32, i32, i32) {
    %c0_i32 = arith.constant 0 : i32
    %c0_i32_0 = arith.constant 0 : i32
    %c0_i32_1 = arith.constant 0 : i32
    return %arg0, %c0_i32, %c0_i32_0 : i32, i32, i32
  }
}

</mosaic_0001>

<llo_original>
// kernel: residual_vq_forward.1
$region0: #{residual_vq_forward.1}
  #allocation0 [shape = 'u32[]', space=smem, size = 0x4, offset = 0x4, fixed_abs, tag = 'smem constant byte address 0x4 - core index']
  #allocation1 [shape = 'u32[144,128]{1,0:T(1,128)}', space=vmem, size = 0x12000, scoped, tag = 'internal scratch']
  %s0 = inlined_call_operand.vmem [shape: f32[32,32], index: 0, kind: input, shape index: {}]
  %s1 = inlined_call_operand.vmem [shape: f32[1,128,32], index: 1, kind: input, shape index: {}]
  %s2 = inlined_call_operand.vmem [shape: f32[1,128], index: 2, kind: input, shape index: {}]
  %s3 = inlined_call_operand.hbm [shape: f32[32,32], index: 3, kind: output, shape index: {0}]
  %s4 = inlined_call_operand.vmem [shape: s32[32,1], index: 4, kind: output, shape index: {1}]
  %s5 = inlined_call_operand.vmem [shape: f32[1,1,128], index: 5, kind: output, shape index: {2}]
  %s6 = inlined_call_operand.vmem [shape: f32[1,1,128], index: 6, kind: output, shape index: {3}]
  %7 = xla_tuple %s3, %s4, %s5, %s6
  %s8 = sld [smem:[#allocation0]]
  $region46: #{residual_vq_forward.1} parent=0
    _
  %s10 = ssub.s32 1, %s8
  %s11 = scalar_select 0, %s10, %s8
  $region1: #{residual_vq_forward.1} parent=0
    #allocation2 [shape = 'u8[16384]{0}', space=vmem, size = 0x4000, scoped, tag = 'output window, operand 0, single buffered']
    #allocation3 [shape = 's32[1]{0}', space=sflag, size = 0x4, scoped, tag = 'scoped memory for residual_vq_forward.1']
    %12 = vsyncpa [#allocation3], 0
    // Predicated region
    $region2: #{residual_vq_forward.1} parent=1 // pred_check
      _
    $region3: #{residual_vq_forward.1} parent=1 // pred_check_branch
      %14 = sbr.rel (0) target = $region5
    $region4: #{residual_vq_forward.1} parent=1 // pred_region
      _
    $region5: #{residual_vq_forward.1} parent=1 // pred_fallthru
      _
    // Predicated region
    $region6: #{residual_vq_forward.1} parent=1 // pred_check
      _
    $region7: #{residual_vq_forward.1} parent=1 // pred_check_branch
      %16 = sbr.rel (0) target = $region9
    $region8: #{residual_vq_forward.1} parent=1 // pred_region
      _
    $region9: #{residual_vq_forward.1} parent=1 // pred_fallthru
      _
    // Predicated region
    $region10: #{residual_vq_forward.1} parent=1 // pred_check
      _
    $region11: #{residual_vq_forward.1} parent=1 // pred_check_branch
      %18 = sbr.rel (0) target = $region13
    $region12: #{residual_vq_forward.1} parent=1 // pred_region
      _
    $region13: #{residual_vq_forward.1} parent=1 // pred_fallthru
      _
    %v19 = vld [vmem:[%s0] sm:$0xff]
    %v20 = vld [vmem:[%s0 + $0x8] sm:$0xff]
    %v21 = vld [vmem:[%s0 + $0x10] sm:$0xff]
    %v22 = vld [vmem:[%s0 + $0x18] sm:$0xff]
    %v23 = vlaneseq
    %v24 = vand.u32 %v23, 127
    %v25 = vlaneseq
    %v26 = vshrl.u32 %v25, 7
    %v27 = vld [vmem:[%s1] sm:$0xff]
    %v28 = vld [vmem:[%s1 + $0x8] sm:$0xff]
    %v29 = vld [vmem:[%s1 + $0x10] sm:$0xff]
    %v30 = vld [vmem:[%s1 + $0x18] sm:$0xff]
    %v31 = vld [vmem:[%s1 + $0x20] sm:$0xff]
    %v32 = vld [vmem:[%s1 + $0x28] sm:$0xff]
    %v33 = vld [vmem:[%s1 + $0x30] sm:$0xff]
    %v34 = vld [vmem:[%s1 + $0x38] sm:$0xff]
    %v35 = vld [vmem:[%s1 + $0x40] sm:$0xff]
    %v36 = vld [vmem:[%s1 + $0x48] sm:$0xff]
    %v37 = vld [vmem:[%s1 + $0x50] sm:$0xff]
    %v38 = vld [vmem:[%s1 + $0x58] sm:$0xff]
    %v39 = vld [vmem:[%s1 + $0x60] sm:$0xff]
    %v40 = vld [vmem:[%s1 + $0x68] sm:$0xff]
    %v41 = vld [vmem:[%s1 + $0x70] sm:$0xff]
    %v42 = vld [vmem:[%s1 + $0x78] sm:$0xff]
    %v43 = vld [vmem:[%s2] sm:$0x1]
    %v44 = vmul.f32 %v19, %v19
    %v45 = vmul.f32 %v20, %v20
    %v46 = vmul.f32 %v21, %v21
    %v47 = vmul.f32 %v22, %v22
    %vm48 = vcmask 261120
    %v49 = vsel %vm48, %v44, 0.0
    %50 = vadd.xlane.f32.xlu0 %v49
    %v51 = vpop.xlane.xlu0 %50
    %v52 = vsel %vm48, %v45, 0.0
    %53 = vadd.xlane.f32.xlu0 %v52
    %v54 = vpop.xlane.xlu0 %53
    %v55 = vsel %vm48, %v46, 0.0
    %56 = vadd.xlane.f32.xlu0 %v55
    %v57 = vpop.xlane.xlu0 %56
    %v58 = vsel %vm48, %v47, 0.0
    %59 = vadd.xlane.f32.xlu0 %v58
    %v60 = vpop.xlane.xlu0 %59
    %v62 = vsel %vm48, %v19, 0
    %v65 = vsel %vm48, %v20, 0
    %v68 = vsel %vm48, %v21, 0
    %v71 = vsel %vm48, %v22, 0
    %v74 = vsel %vm48, %v27, 0
    %v77 = vsel %vm48, %v28, 0
    %v80 = vsel %vm48, %v29, 0
    %v83 = vsel %vm48, %v30, 0
    %v86 = vsel %vm48, %v31, 0
    %v89 = vsel %vm48, %v32, 0
    %v92 = vsel %vm48, %v33, 0
    %v95 = vsel %vm48, %v34, 0
    %v98 = vsel %vm48, %v35, 0
    %v101 = vsel %vm48, %v36, 0
    %v104 = vsel %vm48, %v37, 0
    %v107 = vsel %vm48, %v38, 0
    %v110 = vsel %vm48, %v39, 0
    %v113 = vsel %vm48, %v40, 0
    %v116 = vsel %vm48, %v41, 0
    %v119 = vsel %vm48, %v42, 0
    %121 = vmatprep.subr.mxu0 0.0
    %122 = vmatpush1.xpose.msra.mxu0 %v74
    %123 = vmatprep.subr.mxu0 0.0
    %124 = vmatpush1.xpose.msra.mxu0 %v77
    %125 = vmatprep.subr.mxu0 0.0
    %126 = vmatpush1.xpose.msra.mxu0 %v80
    %127 = vmatprep.subr.mxu0 0.0
    %128 = vmatpush1.xpose.msra.mxu0 %v83
    %129 = vmatprep.subr.mxu0 0.0
    %130 = vmatpush1.xpose.msra.mxu0 %v86
    %131 = vmatprep.subr.mxu0 0.0
    %132 = vmatpush1.xpose.msra.mxu0 %v89
    %133 = vmatprep.subr.mxu0 0.0
    %134 = vmatpush1.xpose.msra.mxu0 %v92
    %135 = vmatprep.subr.mxu0 0.0
    %136 = vmatpush1.xpose.msra.mxu0 %v95
    %137 = vmatprep.subr.mxu0 0.0
    %138 = vmatpush1.xpose.msra.mxu0 %v98
    %139 = vmatprep.subr.mxu0 0.0
    %140 = vmatpush1.xpose.msra.mxu0 %v101
    %141 = vmatprep.subr.mxu0 0.0
    %142 = vmatpush1.xpose.msra.mxu0 %v104
    %143 = vmatprep.subr.mxu0 0.0
    %144 = vmatpush1.xpose.msra.mxu0 %v107
    %145 = vmatprep.subr.mxu0 0.0
    %146 = vmatpush1.xpose.msra.mxu0 %v110
    %147 = vmatprep.subr.mxu0 0.0
    %148 = vmatpush1.xpose.msra.mxu0 %v113
    %149 = vmatprep.subr.mxu0 0.0
    %150 = vmatpush1.xpose.msra.mxu0 %v116
    %151 = vmatprep.subr.mxu0 0.0
    %152 = vmatpush1.xpose.msra.mxu0 %v119
    %153 = vmatprep.subr.mxu0 0.0
    %154 = vmatpush1.xpose.msra.mxu0 0.0
    %155 = vmatprep.subr.mxu0 0.0
    %156 = vmatpush1.xpose.msra.mxu0 0.0
    %157 = vmatprep.subr.mxu0 0.0
    %158 = vmatpush1.xpose.msra.mxu0 0.0
    %159 = vmatprep.subr.mxu0 0.0
    %160 = vmatpush1.xpose.msra.mxu0 0.0
    %161 = vmatprep.subr.mxu0 0.0
    %162 = vmatpush1.xpose.msra.mxu0 0.0
    %163 = vmatprep.subr.mxu0 0.0
    %164 = vmatpush1.xpose.msra.mxu0 0.0
    %165 = vmatprep.subr.mxu0 0.0
    %166 = vmatpush1.xpose.msra.mxu0 0.0
    %167 = vmatprep.subr.mxu0 0.0
    %168 = vmatpush1.xpose.msra.mxu0 0.0
    %169 = vmatprep.subr.mxu0 0.0
    %170 = vmatpush1.xpose.msra.mxu0 0.0
    %171 = vmatprep.subr.mxu0 0.0
    %172 = vmatpush1.xpose.msra.mxu0 0.0
    %173 = vmatprep.subr.mxu0 0.0
    %174 = vmatpush1.xpose.msra.mxu0 0.0
    %175 = vmatprep.subr.mxu0 0.0
    %176 = vmatpush1.xpose.msra.mxu0 0.0
    %177 = vmatprep.subr.mxu0 0.0
    %178 = vmatpush1.xpose.msra.mxu0 0.0
    %179 = vmatprep.subr.mxu0 0.0
    %180 = vmatpush1.xpose.msra.mxu0 0.0
    %181 = vmatprep.subr.mxu0 0.0
    %182 = vmatpush1.xpose.msra.mxu0 0.0
    %183 = vmatprep.subr.mxu0 0.0
    %184 = vmatpush1.xpose.msra.mxu0 0.0
    %185 = vmatprep.mubr.f32.mxu0 0.0
    %186 = vmatmul.mubr.f32.gmra.mrb[0].mxu0 %v62
    %v187 = vpop.f32.mrb[0].mxu0
    %v188 = vadd.f32 0.0, %v187
    %v189 = vpop.f32.mrb[0].mxu0
    %190 = vmatprep.mubr.f32.mxu0 0.0
    %191 = vmatmul.mubr.f32.gmra.mrb[0].mxu0 %v65
    %v192 = vpop.f32.mrb[0].mxu0
    %v193 = vadd.f32 0.0, %v192
    %v194 = vpop.f32.mrb[0].mxu0
    %195 = vmatprep.mubr.f32.mxu0 0.0
    %196 = vmatmul.mubr.f32.gmra.mrb[0].mxu0 %v68
    %v197 = vpop.f32.mrb[0].mxu0
    %v198 = vadd.f32 0.0, %v197
    %v199 = vpop.f32.mrb[0].mxu0
    %200 = vmatprep.mubr.f32.mxu0 0.0
    %201 = vmatmul.mubr.f32.gmra.mrb[0].mxu0 %v71
    %v202 = vpop.f32.mrb[0].mxu0
    %v203 = vadd.f32 0.0, %v202
    %v204 = vpop.f32.mrb[0].mxu0
    %205 = vdwg.mxu0
    %v206 = vmul.f32 %v188, 2.0
    %v207 = vmul.f32 %v193, 2.0
    %v208 = vmul.f32 %v198, 2.0
    %v209 = vmul.f32 %v203, 2.0
    %v210 = vsub.f32 %v51, %v206
    %v211 = vsub.f32 %v54, %v207
    %v212 = vsub.f32 %v57, %v208
    %v213 = vsub.f32 %v60, %v209
    %v215 = vlaneseq
    %v216 = vshrl.u32 %v215, 7
    %v217 = vsub.s32 0, %v216
    %v218 = vrot.slane %v43, %v217
    %v220 = vadd.f32 %v210, %v218
    %v221 = vadd.f32 %v211, %v218
    %v222 = vadd.f32 %v212, %v218
    %v223 = vadd.f32 %v213, %v218
    %224 = vmin.xlane.f32.xlu0 %v220
    %v225 = vpop.xlane.xlu0 %224
    %226 = vmin.xlane.f32.xlu0 %v221
    %v227 = vpop.xlane.xlu0 %226
    %228 = vmin.xlane.f32.xlu0 %v222
    %v229 = vpop.xlane.xlu0 %228
    %230 = vmin.xlane.f32.xlu0 %v223
    %v231 = vpop.xlane.xlu0 %230
    %vm232 = vcmp.eq.f32.partialorder %v220, %v225
    %vm233 = vcmp.eq.f32.partialorder %v221, %v227
    %vm234 = vcmp.eq.f32.partialorder %v222, %v229
    %vm235 = vcmp.eq.f32.partialorder %v223, %v231
    %v236 = vsel %vm232, %v24, 128
    %v237 = vsel %vm233, %v24, 128
    %v238 = vsel %vm234, %v24, 128
    %v239 = vsel %vm235, %v24, 128
    %v240 = vand.u32 %v236, 65535
    %v241 = vshra.s32 %v236, 16
    %v242 = vcvt.s32.f32 %v240
    %v243 = vcvt.s32.f32 %v241
    %244 = vmin.xlane.f32.xlu0 %v243
    %v245 = vpop.xlane.xlu0 %244
    %vm246 = vcmp.eq.f32.partialorder %v243, %v245
    %v247 = vsel %vm246, %v242, inf
    %248 = vmin.xlane.f32.xlu0 %v247
    %v249 = vpop.xlane.xlu0 %248
    %v250 = vcvt.f32.s32 %v249
    %v251 = vcvt.f32.s32 %v245
    %v252 = vshll.u32 %v251, 16
    %v253 = vadd.s32 %v252, %v250
    %v254 = vand.u32 %v237, 65535
    %v255 = vshra.s32 %v237, 16
    %v256 = vcvt.s32.f32 %v254
    %v257 = vcvt.s32.f32 %v255
    %258 = vmin.xlane.f32.xlu0 %v257
    %v259 = vpop.xlane.xlu0 %258
    %vm260 = vcmp.eq.f32.partialorder %v257, %v259
    %v261 = vsel %vm260, %v256, inf
    %262 = vmin.xlane.f32.xlu0 %v261
    %v263 = vpop.xlane.xlu0 %262
    %v264 = vcvt.f32.s32 %v263
    %v265 = vcvt.f32.s32 %v259
    %v266 = vshll.u32 %v265, 16
    %v267 = vadd.s32 %v266, %v264
    %v268 = vand.u32 %v238, 65535
    %v269 = vshra.s32 %v238, 16
    %v270 = vcvt.s32.f32 %v268
    %v271 = vcvt.s32.f32 %v269
    %272 = vmin.xlane.f32.xlu0 %v271
    %v273 = vpop.xlane.xlu0 %272
    %vm274 = vcmp.eq.f32.partialorder %v271, %v273
    %v275 = vsel %vm274, %v270, inf
    %276 = vmin.xlane.f32.xlu0 %v275
    %v277 = vpop.xlane.xlu0 %276
    %v278 = vcvt.f32.s32 %v277
    %v279 = vcvt.f32.s32 %v273
    %v280 = vshll.u32 %v279, 16
    %v281 = vadd.s32 %v280, %v278
    %v282 = vand.u32 %v239, 65535
    %v283 = vshra.s32 %v239, 16
    %v284 = vcvt.s32.f32 %v282
    %v285 = vcvt.s32.f32 %v283
    %286 = vmin.xlane.f32.xlu0 %v285
    %v287 = vpop.xlane.xlu0 %286
    %vm288 = vcmp.eq.f32.partialorder %v285, %v287
    %v289 = vsel %vm288, %v284, inf
    %290 = vmin.xlane.f32.xlu0 %v289
    %v291 = vpop.xlane.xlu0 %290
    %v292 = vcvt.f32.s32 %v291
    %v293 = vcvt.f32.s32 %v287
    %v294 = vshll.u32 %v293, 16
    %v295 = vadd.s32 %v294, %v292
    %vm296 = vcmp.eq.s32.totalorder %v24, %v253
    %vm297 = vcmp.eq.s32.totalorder %v24, %v267
    %vm298 = vcmp.eq.s32.totalorder %v24, %v281
    %vm299 = vcmp.eq.s32.totalorder %v24, %v295
    %v300 = vsel %vm296, 1, 0
    %v301 = vsel %vm297, 1, 0
    %v302 = vsel %vm298, 1, 0
    %v303 = vsel %vm299, 1, 0
    %v304 = vcvt.s32.f32 %v300
    %v305 = vcvt.s32.f32 %v301
    %v306 = vcvt.s32.f32 %v302
    %v307 = vcvt.s32.f32 %v303
    %308 = vmatprep.subr.mxu0 0.0
    %309 = vmatpush1.msra.mxu0 %v27
    %310 = vmatprep.subr.mxu0 0.0
    %311 = vmatpush1.msra.mxu0 %v28
    %312 = vmatprep.subr.mxu0 0.0
    %313 = vmatpush1.msra.mxu0 %v29
    %314 = vmatprep.subr.mxu0 0.0
    %315 = vmatpush1.msra.mxu0 %v30
    %316 = vmatprep.subr.mxu0 0.0
    %317 = vmatpush1.msra.mxu0 %v31
    %318 = vmatprep.subr.mxu0 0.0
    %319 = vmatpush1.msra.mxu0 %v32
    %320 = vmatprep.subr.mxu0 0.0
    %321 = vmatpush1.msra.mxu0 %v33
    %322 = vmatprep.subr.mxu0 0.0
    %323 = vmatpush1.msra.mxu0 %v34
    %324 = vmatprep.subr.mxu0 0.0
    %325 = vmatpush1.msra.mxu0 %v35
    %326 = vmatprep.subr.mxu0 0.0
    %327 = vmatpush1.msra.mxu0 %v36
    %328 = vmatprep.subr.mxu0 0.0
    %329 = vmatpush1.msra.mxu0 %v37
    %330 = vmatprep.subr.mxu0 0.0
    %331 = vmatpush1.msra.mxu0 %v38
    %332 = vmatprep.subr.mxu0 0.0
    %333 = vmatpush1.msra.mxu0 %v39
    %334 = vmatprep.subr.mxu0 0.0
    %335 = vmatpush1.msra.mxu0 %v40
    %336 = vmatprep.subr.mxu0 0.0
    %337 = vmatpush1.msra.mxu0 %v41
    %338 = vmatprep.subr.mxu0 0.0
    %339 = vmatpush1.msra.mxu0 %v42
    %340 = vmatprep.subr.mxu0 0.0
    %341 = vmatpush1.msra.mxu0 0.0
    %342 = vmatprep.subr.mxu0 0.0
    %343 = vmatpush1.msra.mxu0 0.0
    %344 = vmatprep.subr.mxu0 0.0
    %345 = vmatpush1.msra.mxu0 0.0
    %346 = vmatprep.subr.mxu0 0.0
    %347 = vmatpush1.msra.mxu0 0.0
    %348 = vmatprep.subr.mxu0 0.0
    %349 = vmatpush1.msra.mxu0 0.0
    %350 = vmatprep.subr.mxu0 0.0
    %351 = vmatpush1.msra.mxu0 0.0
    %352 = vmatprep.subr.mxu0 0.0
    %353 = vmatpush1.msra.mxu0 0.0
    %354 = vmatprep.subr.mxu0 0.0
    %355 = vmatpush1.msra.mxu0 0.0
    %356 = vmatprep.subr.mxu0 0.0
    %357 = vmatpush1.msra.mxu0 0.0
    %358 = vmatprep.subr.mxu0 0.0
    %359 = vmatpush1.msra.mxu0 0.0
    %360 = vmatprep.subr.mxu0 0.0
    %361 = vmatpush1.msra.mxu0 0.0
    %362 = vmatprep.subr.mxu0 0.0
    %363 = vmatpush1.msra.mxu0 0.0
    %364 = vmatprep.subr.mxu0 0.0
    %365 = vmatpush1.msra.mxu0 0.0
    %366 = vmatprep.subr.mxu0 0.0
    %367 = vmatpush1.msra.mxu0 0.0
    %368 = vmatprep.subr.mxu0 0.0
    %369 = vmatpush1.msra.mxu0 0.0
    %370 = vmatprep.subr.mxu0 0.0
    %371 = vmatpush1.msra.mxu0 0.0
    %372 = vmatprep.mubr.f32.mxu0 0.0
    %373 = vmatmul.mubr.f32.gmra.mrb[0].mxu0 %v304
    %v374 = vpop.f32.mrb[0].mxu0
    %v375 = vadd.f32 0.0, %v374
    %v376 = vpop.f32.mrb[0].mxu0
    %377 = vmatprep.mubr.f32.mxu0 0.0
    %378 = vmatmul.mubr.f32.gmra.mrb[0].mxu0 %v305
    %v379 = vpop.f32.mrb[0].mxu0
    %v380 = vadd.f32 0.0, %v379
    %v381 = vpop.f32.mrb[0].mxu0
    %382 = vmatprep.mubr.f32.mxu0 0.0
    %383 = vmatmul.mubr.f32.gmra.mrb[0].mxu0 %v306
    %v384 = vpop.f32.mrb[0].mxu0
    %v385 = vadd.f32 0.0, %v384
    %v386 = vpop.f32.mrb[0].mxu0
    %387 = vmatprep.mubr.f32.mxu0 0.0
    %388 = vmatmul.mubr.f32.gmra.mrb[0].mxu0 %v307
    %v389 = vpop.f32.mrb[0].mxu0
    %v390 = vadd.f32 0.0, %v389
    %v391 = vpop.f32.mrb[0].mxu0
    %392 = vdwg.mxu0
    %v393 = vsub.f32 %v19, %v375
    %v394 = vsub.f32 %v20, %v380
    %v395 = vsub.f32 %v21, %v385
    %v396 = vsub.f32 %v22, %v390
    %v397 = vadd.f32 %v375, 0.0
    %v398 = vadd.f32 %v380, 0.0
    %v399 = vadd.f32 %v385, 0.0
    %v400 = vadd.f32 %v390, 0.0
    %vm401 = vcmp.eq.s32.totalorder %v24, 0
    %v402 = vsel %vm401, %v253, 0
    %v403 = vsel %vm401, %v267, 0
    %v404 = vsel %vm401, %v281, 0
    %v405 = vsel %vm401, %v295, 0
    %vm406 = vcmp.eq.s32.totalorder %v26, 0
    %v407 = vadd.f32 %v304, %v305
    %v408 = vadd.f32 %v407, %v306
    %v409 = vadd.f32 %v408, %v307
    %v410 = vrot.slane %v409, 4
    %v411 = vadd.f32 %v409, %v410
    %v412 = vrot.slane %v411, 2
    %v413 = vadd.f32 %v411, %v412
    %v414 = vrot.slane %v413, 1
    %v415 = vadd.f32 %v413, %v414
    %v416 = vsel %vm406, %v415, 0.0
    %v417 = vmul.f32 %v393, %v393
    %v418 = vmul.f32 %v394, %v394
    %v419 = vmul.f32 %v395, %v395
    %v420 = vmul.f32 %v396, %v396
    %v421 = vsel %vm48, %v417, 0.0
    %v422 = vsel %vm48, %v418, 0.0
    %v423 = vadd.f32 %v421, %v422
    %v424 = vsel %vm48, %v419, 0.0
    %v425 = vadd.f32 %v423, %v424
    %v426 = vsel %vm48, %v420, 0.0
    %v427 = vadd.f32 %v425, %v426
    %428 = vadd.xlane.f32.xlu0 %v427
    %v429 = vpop.xlane.xlu0 %428
    %v430 = vrot.slane %v429, 4
    %v431 = vadd.f32 %v429, %v430
    %v432 = vrot.slane %v431, 2
    %v433 = vadd.f32 %v431, %v432
    %v434 = vrot.slane %v433, 1
    %v435 = vadd.f32 %v433, %v434
    %s436 = vtos %v435
    %v437 = vstv %s436
    %v438 = vsel %vm406, %v437, 0.0
    %439 = vst.msk [vmem:[#allocation2] sm:$0xff] %vm48, %v397
    %440 = vst.msk [vmem:[#allocation2 + $0x8] sm:$0xff] %vm48, %v398
    %441 = vst.msk [vmem:[#allocation2 + $0x10] sm:$0xff] %vm48, %v399
    %442 = vst.msk [vmem:[#allocation2 + $0x18] sm:$0xff] %vm48, %v400
    %vm443 = vcmask 7168
    %444 = vst.msk [vmem:[%s4] sm:$0xff] %vm443, %v402
    %445 = vst.msk [vmem:[%s4 + $0x8] sm:$0xff] %vm443, %v403
    %446 = vst.msk [vmem:[%s4 + $0x10] sm:$0xff] %vm443, %v404
    %447 = vst.msk [vmem:[%s4 + $0x18] sm:$0xff] %vm443, %v405
    %448 = vst [vmem:[%s5] sm:$0x1] %v416
    %449 = vst [vmem:[%s6] sm:$0x1] %v438
    // Predicated region
    $region14: #{residual_vq_forward.1} parent=1 // pred_check
      _
    $region15: #{residual_vq_forward.1} parent=1 // pred_check_branch
      %451 = sbr.rel (0) target = $region17
    $region16: #{residual_vq_forward.1} parent=1 // pred_region
      %s453 = ssub.s32 512, 512
      %454 = vsyncadd [#allocation3], %s453
      %s455 = sshll.u32 [#allocation2], 4
      %s456 = int_to_ptr.vmem [resolvable:$true] %s455
      %461 = dma.vmem_to_hbm [thread:$0]  %s456, 512, %s3, [#allocation3], 128, 128, 8
    $region17: #{residual_vq_forward.1} parent=1 // pred_fallthru
      _
    // Predicated region
    $region18: #{residual_vq_forward.1} parent=1 // pred_check
      _
    $region19: #{residual_vq_forward.1} parent=1 // pred_check_branch
      %463 = sbr.rel (0) target = $region21
    $region20: #{residual_vq_forward.1} parent=1 // pred_region
      _
    $region21: #{residual_vq_forward.1} parent=1 // pred_fallthru
      _
    // Predicated region
    $region22: #{residual_vq_forward.1} parent=1 // pred_check
      _
    $region23: #{residual_vq_forward.1} parent=1 // pred_check_branch
      %465 = sbr.rel (0) target = $region25
    $region24: #{residual_vq_forward.1} parent=1 // pred_region
      _
    $region25: #{residual_vq_forward.1} parent=1 // pred_fallthru
      _
    // Predicated region
    $region26: #{residual_vq_forward.1} parent=1 // pred_check
      _
    $region27: #{residual_vq_forward.1} parent=1 // pred_check_branch
      %467 = sbr.rel (0) target = $region29
    $region28: #{residual_vq_forward.1} parent=1 // pred_region
      _
    $region29: #{residual_vq_forward.1} parent=1 // pred_fallthru
      _
    // Predicated region
    $region30: #{residual_vq_forward.1} parent=1 // pred_check
      _
    $region31: #{residual_vq_forward.1} parent=1 // pred_check_branch
      %469 = sbr.rel (0) target = $region33
    $region32: #{residual_vq_forward.1} parent=1 // pred_region
      %470 = dma.done [#allocation3], 512
    $region33: #{residual_vq_forward.1} parent=1 // pred_fallthru
      _
    // Predicated region
    $region34: #{residual_vq_forward.1} parent=1 // pred_check
      _
    $region35: #{residual_vq_forward.1} parent=1 // pred_check_branch
      %472 = sbr.rel (0) target = $region37
    $region36: #{residual_vq_forward.1} parent=1 // pred_region
      _
    $region37: #{residual_vq_forward.1} parent=1 // pred_fallthru
      _
    // Predicated region
    $region38: #{residual_vq_forward.1} parent=1 // pred_check
      _
    $region39: #{residual_vq_forward.1} parent=1 // pred_check_branch
      %474 = sbr.rel (0) target = $region41
    $region40: #{residual_vq_forward.1} parent=1 // pred_region
      _
    $region41: #{residual_vq_forward.1} parent=1 // pred_fallthru
      _
    // Predicated region
    $region42: #{residual_vq_forward.1} parent=1 // pred_check
      _
    $region43: #{residual_vq_forward.1} parent=1 // pred_check_branch
      %476 = sbr.rel (0) target = $region45
    $region44: #{residual_vq_forward.1} parent=1 // pred_region
      _
    $region45: #{residual_vq_forward.1} parent=1 // pred_fallthru
      _
    %477 = vsyncpa [#allocation3], 1

</llo_original>
